<compile_context>
chip_gen: v5e
topology: v5e:2x2
jax: 0.10.0
libtpu: 0.0.40
codegen_flags: <defaults>
</compile_context>

<pallas_src>
import functools

import jax
import jax.numpy as jnp
from jax.experimental import pallas as pl
from jax.experimental.pallas import tpu as pltpu


def _nonlocal_kernel(x_ref, w_tpg_ref, b_tpg_ref, w_out_ref, b_out_ref, o_ref,
                     *, ci, hw, hwp):
    # x_ref block: (1, C, HWp)
    x = x_ref[0].astype(jnp.float32)                              # (C, HWp)

    # theta / phi / g 1x1 convs fused into a single MXU matmul.
    tpg = jnp.dot(w_tpg_ref[...], x,
                  preferred_element_type=jnp.float32) + b_tpg_ref[...]  # (3Ci, HWp)
    theta = tpg[0 * ci:1 * ci]                                    # (Ci, HWp)
    phi = tpg[1 * ci:2 * ci]                                      # (Ci, HWp)
    g = tpg[2 * ci:3 * ci]                                        # (Ci, HWp)

    # fT[j, i] = sum_c phi[c, j] * theta[c, i]  == f[i, j] in the PyTorch code,
    # so PyTorch's softmax(dim=1) (over queries i) becomes a last-axis (lane)
    # softmax of fT.
    fT = jax.lax.dot_general(phi, theta, (((0,), (0,)), ((), ())),
                             preferred_element_type=jnp.float32)  # (HWp, HWp)

    if hw != hwp:
        # Spatial padding: padded *query* columns (i >= hw) must get no softmax
        # mass; padded *key* rows (j >= hw) must not contribute to y.  Use a
        # single (1, HWp) lane mask and let jnp.where broadcast it.
        lane_valid = jax.lax.broadcasted_iota(jnp.int32, (1, hwp), 1) < hw
        fT = jnp.where(lane_valid, fT, -1e30)
        g = jnp.where(lane_valid, g, 0.0)

    m = jnp.max(fT, axis=-1, keepdims=True)
    e = jnp.exp(fT - m)
    denom = jnp.sum(e, axis=-1, keepdims=True)
    s = e * pl.reciprocal(denom, approx=True)                     # softmax over queries

    # y[c, i] = sum_j g[c, j] * s[j, i]  (== (f_div_C @ g_x)^T in PyTorch)
    y = jnp.dot(g, s, preferred_element_type=jnp.float32)         # (Ci, HWp)

    w_y = jnp.dot(w_out_ref[...], y,
                  preferred_element_type=jnp.float32) + b_out_ref[...]  # (C, HWp)
    o_ref[0] = (w_y + x).astype(o_ref.dtype)


@functools.partial(jax.jit, static_argnames=())
def nonlocal_block_2d(x, w_theta, b_theta, w_phi, b_phi, w_g, b_g, w_out, b_out):
    """x: (B, C, H, W) float32 or bfloat16. Returns same shape/dtype."""
    B, C, H, W = x.shape
    Ci = w_theta.shape[0]
    HW = H * W
    HWp = ((HW + 127) // 128) * 128          # lane-dense spatial slab (avoid vst.msk)

    x3 = x.reshape(B, C, HW)
    if HWp != HW:
        x3 = jnp.pad(x3, ((0, 0), (0, 0), (0, HWp - HW)))

    f32 = jnp.float32
    w_tpg = jnp.concatenate([w_theta, w_phi, w_g], axis=0).astype(f32)          # (3Ci, C)
    b_tpg = jnp.concatenate([b_theta, b_phi, b_g], axis=0).reshape(3 * Ci, 1).astype(f32)
    w_o = w_out.astype(f32)                                                      # (C, Ci)
    b_o = b_out.reshape(C, 1).astype(f32)

    # Per-grid-step VMEM: double-buffered in/out slabs + affinity matrix +
    # softmax temporaries + intermediates.  Raise the scoped limit but leave
    # headroom under v7x's 64 MiB physical VMEM.
    # TODO(synk): for large feature maps (3 * HWp^2 f32 exceeding this budget) a
    # flash-attention-style query/key tiling of the (HW, HW) affinity is needed.
    est = 4 * (3 * HWp * HWp + 6 * C * HWp + 8 * Ci * HWp
               + (3 * Ci * C + C * Ci + 3 * Ci + C))
    vmem_limit = int(min(56 * 2 ** 20, max(32 * 2 ** 20, 2 * est)))

    kernel = functools.partial(_nonlocal_kernel, ci=Ci, hw=HW, hwp=HWp)

    out3 = pl.pallas_call(
        kernel,
        out_shape=jax.ShapeDtypeStruct((B, C, HWp), x.dtype),
        grid_spec=pltpu.PrefetchScalarGridSpec(
            num_scalar_prefetch=0,
            grid=(B,),
            in_specs=[
                pl.BlockSpec((1, C, HWp), lambda b: (b, 0, 0)),   # x slab
                pl.BlockSpec((3 * Ci, C), lambda b: (0, 0)),      # theta/phi/g weights
                pl.BlockSpec((3 * Ci, 1), lambda b: (0, 0)),      # theta/phi/g biases
                pl.BlockSpec((C, Ci), lambda b: (0, 0)),          # W weight
                pl.BlockSpec((C, 1), lambda b: (0, 0)),           # W bias
            ],
            out_specs=pl.BlockSpec((1, C, HWp), lambda b: (b, 0, 0)),
        ),
        input_output_aliases={0: 0},       # z written back over the x slab
        compiler_params=pltpu.CompilerParams(
            dimension_semantics=("parallel",),
            vmem_limit_bytes=vmem_limit),
    )(x3, w_tpg, b_tpg, w_o, b_o)

    if HWp != HW:
        out3 = out3[:, :, :HW]
    return out3.reshape(B, C, H, W)


def nonlocal_block_2d_ref(x, w_theta, b_theta, w_phi, b_phi, w_g, b_g, w_out, b_out):
    """Pure-JAX reference mirroring the PyTorch forward exactly."""
    B, C, H, W = x.shape
    Ci = w_theta.shape[0]
    hp = jax.lax.Precision.HIGHEST

    def conv1x1(t, w, b):
        return jnp.einsum('oc,bchw->bohw', w, t, precision=hp) + b[None, :, None, None]

    theta = conv1x1(x, w_theta, b_theta).reshape(B, Ci, -1).transpose(0, 2, 1)  # (B,HW,Ci)
    phi = conv1x1(x, w_phi, b_phi).reshape(B, Ci, -1)                            # (B,Ci,HW)
    f = jnp.einsum('bic,bcj->bij', theta, phi, precision=hp)                     # (B,HW,HW)
    f_div_c = jax.nn.softmax(f, axis=1)                                          # dim=1 !
    g = conv1x1(x, w_g, b_g).reshape(B, Ci, -1).transpose(0, 2, 1)               # (B,HW,Ci)
    y = jnp.einsum('bij,bjc->bic', f_div_c, g, precision=hp)                     # (B,HW,Ci)
    y = y.transpose(0, 2, 1).reshape(B, Ci, H, W)
    w_y = conv1x1(y, w_out, b_out)
    return w_y + x


if __name__ == "__main__":
    B, C, Ci = 2, 32, 16
    scale = 0.1

    key = jax.random.PRNGKey(0)
    ks = jax.random.split(key, 9)

    # NOTE: the PyTorch module initializes W.weight/bias to zero (so z == x at
    # init); here all params are random so the full attention path is tested.
    w_theta = jax.random.normal(ks[1], (Ci, C), jnp.float32) * scale
    b_theta = jax.random.normal(ks[2], (Ci,), jnp.float32) * scale
    w_phi = jax.random.normal(ks[3], (Ci, C), jnp.float32) * scale
    b_phi = jax.random.normal(ks[4], (Ci,), jnp.float32) * scale
    w_g = jax.random.normal(ks[5], (Ci, C), jnp.float32) * scale
    b_g = jax.random.normal(ks[6], (Ci,), jnp.float32) * scale
    w_out = jax.random.normal(ks[7], (C, Ci), jnp.float32) * scale
    b_out = jax.random.normal(ks[8], (C,), jnp.float32) * scale
    params = (w_theta, b_theta, w_phi, b_phi, w_g, b_g, w_out, b_out)

    # 1) f32, lane-aligned spatial size (H*W = 256, multiple of 128)
    x = jax.random.normal(ks[0], (B, C, 16, 16), jnp.float32)
    ref = nonlocal_block_2d_ref(x, *params)
    out = jax.block_until_ready(nonlocal_block_2d(x, *params))
    assert out.shape == x.shape
    assert jnp.allclose(out, ref, atol=2e-2, rtol=2e-2), "f32 mismatch vs reference"

    # 2) f32, non-aligned spatial size (H*W = 196 -> padded + masked to 256)
    x2 = jax.random.normal(jax.random.PRNGKey(1), (B, C, 14, 14), jnp.float32)
    ref2 = nonlocal_block_2d_ref(x2, *params)
    out2 = jax.block_until_ready(nonlocal_block_2d(x2, *params))
    assert jnp.allclose(out2, ref2, atol=2e-2, rtol=2e-2), "padded mismatch vs reference"

    # 3) bf16 I/O path (half the HBM traffic; math stays f32 inside the kernel)
    out_bf16 = jax.block_until_ready(nonlocal_block_2d(x.astype(jnp.bfloat16), *params))
    assert out_bf16.dtype == jnp.bfloat16
    assert float(jnp.max(jnp.abs(out_bf16.astype(jnp.float32) - ref))) < 0.1, "bf16 mismatch"

    print("KERNEL_OK")
</pallas_src>

<mosaic_0001>
module attributes {stable_mosaic.version = 11 : i64} {
  func.func @_nonlocal_kernel(%arg0: i32, %arg1: memref<1x32x256xf32, #tpu.memory_space<vmem>>, %arg2: memref<48x32xf32, #tpu.memory_space<vmem>>, %arg3: memref<48x1xf32, #tpu.memory_space<vmem>>, %arg4: memref<32x16xf32, #tpu.memory_space<vmem>>, %arg5: memref<32x1xf32, #tpu.memory_space<vmem>>, %arg6: memref<1x32x256xf32, #tpu.memory_space<vmem>>) attributes {dimension_semantics = [#tpu.dimension_semantics<parallel>], iteration_bounds = array<i64: 2>, scalar_prefetch = 0 : i64, scratch_operands = 0 : i64, tpu.core_type = #tpu.core_type<tc>, window_params = [{transform_indices = @transform_0, window_bounds = array<i64: 1, 32, 256>}, {pipeline_mode = #tpu.pipeline_mode<synchronous>, transform_indices = @transform_1, window_bounds = array<i64: 48, 32>}, {pipeline_mode = #tpu.pipeline_mode<synchronous>, transform_indices = @transform_2, window_bounds = array<i64: 48, 1>}, {pipeline_mode = #tpu.pipeline_mode<synchronous>, transform_indices = @transform_3, window_bounds = array<i64: 32, 16>}, {pipeline_mode = #tpu.pipeline_mode<synchronous>, transform_indices = @transform_4, window_bounds = array<i64: 32, 1>}, {transform_indices = @transform_5, window_bounds = array<i64: 1, 32, 256>}]} {
    %c0 = arith.constant 0 : index
    %c0_0 = arith.constant 0 : index
    %c0_1 = arith.constant 0 : index
    %0 = vector.load %arg1[%c0, %c0_0, %c0_1] : memref<1x32x256xf32, #tpu.memory_space<vmem>>, vector<1x32x256xf32>
    %1 = vector.shape_cast %0 : vector<1x32x256xf32> to vector<32x256xf32>
    %c0_2 = arith.constant 0 : index
    %c0_3 = arith.constant 0 : index
    %2 = vector.load %arg2[%c0_2, %c0_3] : memref<48x32xf32, #tpu.memory_space<vmem>>, vector<48x32xf32>
    %cst = arith.constant dense<0.000000e+00> : vector<48x256xf32>
    %3 = tpu.matmul %2, %1, %cst {dimension_numbers = #tpu.dot_dimension_numbers<[1], [0], [0], [1], [0, 0, 1, 1], [], []>} : vector<48x32xf32>, vector<32x256xf32>, vector<48x256xf32> -> vector<48x256xf32>
    %c0_4 = arith.constant 0 : index
    %c0_5 = arith.constant 0 : index
    %4 = vector.load %arg3[%c0_4, %c0_5] : memref<48x1xf32, #tpu.memory_space<vmem>>, vector<48x1xf32>
    %5 = vector.broadcast %4 : vector<48x1xf32> to vector<48x256xf32>
    %6 = arith.addf %3, %5 : vector<48x256xf32>
    %7 = vector.extract_strided_slice %6 {offsets = [0, 0], sizes = [16, 256], strides = [1, 1]} : vector<48x256xf32> to vector<16x256xf32>
    %8 = vector.extract_strided_slice %6 {offsets = [16, 0], sizes = [16, 256], strides = [1, 1]} : vector<48x256xf32> to vector<16x256xf32>
    %9 = vector.extract_strided_slice %6 {offsets = [32, 0], sizes = [16, 256], strides = [1, 1]} : vector<48x256xf32> to vector<16x256xf32>
    %cst_6 = arith.constant dense<0.000000e+00> : vector<256x256xf32>
    %10 = tpu.matmul %8, %7, %cst_6 {dimension_numbers = #tpu.dot_dimension_numbers<[0], [0], [1], [1], [0, 1, 1, 1], [], []>} : vector<16x256xf32>, vector<16x256xf32>, vector<256x256xf32> -> vector<256x256xf32>
    %cst_7 = arith.constant dense<0xFF800000> : vector<256xf32>
    %11 = vector.multi_reduction <maximumf>, %10, %cst_7 [1] : vector<256x256xf32> to vector<256xf32>
    %12 = vector.shape_cast %11 : vector<256xf32> to vector<256x1xf32>
    %13 = vector.broadcast %12 : vector<256x1xf32> to vector<256x256xf32>
    %14 = arith.subf %10, %13 : vector<256x256xf32>
    %15 = math.exp %14 : vector<256x256xf32>
    %cst_8 = arith.constant dense<0.000000e+00> : vector<256xf32>
    %16 = vector.multi_reduction <add>, %15, %cst_8 [1] : vector<256x256xf32> to vector<256xf32>
    %17 = vector.shape_cast %16 : vector<256xf32> to vector<256x1xf32>
    %18 = tpu.reciprocal %17 {approx = true} : vector<256x1xf32> -> vector<256x1xf32>
    %19 = vector.broadcast %18 : vector<256x1xf32> to vector<256x256xf32>
    %20 = arith.mulf %15, %19 : vector<256x256xf32>
    %cst_9 = arith.constant dense<0.000000e+00> : vector<16x256xf32>
    %21 = tpu.matmul %9, %20, %cst_9 {dimension_numbers = #tpu.dot_dimension_numbers<[1], [0], [0], [1], [0, 0, 1, 1], [], []>} : vector<16x256xf32>, vector<256x256xf32>, vector<16x256xf32> -> vector<16x256xf32>
    %c0_10 = arith.constant 0 : index
    %c0_11 = arith.constant 0 : index
    %22 = vector.load %arg4[%c0_10, %c0_11] : memref<32x16xf32, #tpu.memory_space<vmem>>, vector<32x16xf32>
    %cst_12 = arith.constant dense<0.000000e+00> : vector<32x256xf32>
    %23 = tpu.matmul %22, %21, %cst_12 {dimension_numbers = #tpu.dot_dimension_numbers<[1], [0], [0], [1], [0, 0, 1, 1], [], []>} : vector<32x16xf32>, vector<16x256xf32>, vector<32x256xf32> -> vector<32x256xf32>
    %c0_13 = arith.constant 0 : index
    %c0_14 = arith.constant 0 : index
    %24 = vector.load %arg5[%c0_13, %c0_14] : memref<32x1xf32, #tpu.memory_space<vmem>>, vector<32x1xf32>
    %25 = vector.broadcast %24 : vector<32x1xf32> to vector<32x256xf32>
    %26 = arith.addf %23, %25 : vector<32x256xf32>
    %27 = arith.addf %26, %1 : vector<32x256xf32>
    %c0_15 = arith.constant 0 : index
    %c0_16 = arith.constant 0 : index
    %c0_17 = arith.constant 0 : index
    %28 = vector.load %arg6[%c0_15, %c0_16, %c0_17] : memref<1x32x256xf32, #tpu.memory_space<vmem>>, vector<1x32x256xf32>
    %29 = vector.shape_cast %28 : vector<1x32x256xf32> to vector<32x256xf32>
    %30 = vector.shape_cast %27 : vector<32x256xf32> to vector<1x32x256xf32>
    tpu.vector_store %arg6[%c0_15, %c0_16, %c0_17], %30 {strides = array<i32>} : memref<1x32x256xf32, #tpu.memory_space<vmem>>, vector<1x32x256xf32>,
    return
  }
  func.func @transform_0(%arg0: i32) -> (i32, i32, i32) {
    %c0_i32 = arith.constant 0 : i32
    %c0_i32_0 = arith.constant 0 : i32
    %c0_i32_1 = arith.constant 0 : i32
    return %arg0, %c0_i32, %c0_i32_0 : i32, i32, i32
  }
  func.func @transform_1(%arg0: i32) -> (i32, i32) {
    %c0_i32 = arith.constant 0 : i32
    %c0_i32_0 = arith.constant 0 : i32
    %c0_i32_1 = arith.constant 0 : i32
    return %c0_i32, %c0_i32_0 : i32, i32
  }
  func.func @transform_2(%arg0: i32) -> (i32, i32) {
    %c0_i32 = arith.constant 0 : i32
    %c0_i32_0 = arith.constant 0 : i32
    %c0_i32_1 = arith.constant 0 : i32
    return %c0_i32, %c0_i32_0 : i32, i32
  }
  func.func @transform_3(%arg0: i32) -> (i32, i32) {
    %c0_i32 = arith.constant 0 : i32
    %c0_i32_0 = arith.constant 0 : i32
    %c0_i32_1 = arith.constant 0 : i32
    return %c0_i32, %c0_i32_0 : i32, i32
  }
  func.func @transform_4(%arg0: i32) -> (i32, i32) {
    %c0_i32 = arith.constant 0 : i32
    %c0_i32_0 = arith.constant 0 : i32
    %c0_i32_1 = arith.constant 0 : i32
    return %c0_i32, %c0_i32_0 : i32, i32
  }
  func.func @transform_5(%arg0: i32) -> (i32, i32, i32) {
    %c0_i32 = arith.constant 0 : i32
    %c0_i32_0 = arith.constant 0 : i32
    %c0_i32_1 = arith.constant 0 : i32
    return %arg0, %c0_i32, %c0_i32_0 : i32, i32, i32
  }
}

</mosaic_0001>

<llo_original>
// kernel: nonlocal_block_2d.1
$region0: #{nonlocal_block_2d.1}
  #allocation0 [shape = 'u32[]', space=smem, size = 0x4, offset = 0x4, fixed_abs, tag = 'smem constant byte address 0x4 - core index']
  #allocation1 [shape = 'u32[72,128]{1,0:T(1,128)}', space=vmem, size = 0x9000, scoped, tag = 'internal scratch']
  %s0 = inlined_call_operand.vmem [shape: f32[2,32,256], index: 0, kind: input, shape index: {}, may-alias: {0,5}]
  %s1 = inlined_call_operand.vmem [shape: f32[48,32], index: 1, kind: input, shape index: {}]
  %s2 = inlined_call_operand.vmem [shape: f32[48,1], index: 2, kind: input, shape index: {}]
  %s3 = inlined_call_operand.vmem [shape: f32[32,16], index: 3, kind: input, shape index: {}]
  %s4 = inlined_call_operand.vmem [shape: f32[32,1], index: 4, kind: input, shape index: {}]
  %s5 = inlined_call_operand.vmem [shape: f32[2,32,256], index: 5, kind: output, shape index: {}, may-alias: {0,5}]
  %s6 = sld [smem:[#allocation0]]
  $region53: #{nonlocal_block_2d.1} parent=0
    _
  %s8 = ssub.s32 1, %s6
  %s9 = scalar_select 0, %s8, %s6
  loop: start=0, step=1, limit=4
  $region2: #{nonlocal_block_2d.1} parent=0 // loop_pre_header
    _
  $region3: #{nonlocal_block_2d.1} parent=0 // loop_header
    %s11 = sphi 0, %s15
    %p12 = scmp.ge.s32.totalorder %s11, 4
    %s21 = sphi 0, %s23
    %s24 = sphi 0, %s21
    %s25 = sphi 0, %s24
    %s41 = sphi 0, %s25
    %s45 = sphi 0, %s45
    %s47 = sphi 0, %s45
    %s48 = sphi 0, %s47
    %s62 = sphi 0, %s48
    %s66 = sphi 0, %s66
    %s68 = sphi 0, %s66
    %s69 = sphi 0, %s68
    %s83 = sphi 0, %s69
    %s87 = sphi 0, %s87
    %s89 = sphi 0, %s87
    %s90 = sphi 0, %s89
    %s104 = sphi 0, %s90
    %s108 = sphi 0, %s108
    %s110 = sphi 0, %s108
    %s111 = sphi 0, %s110
    %s125 = sphi 0, %s111
    %s131 = sphi 0, %s133
    %s134 = sphi 0, %s131
    %s135 = sphi 0, %s134
    %s151 = sphi 0, %s135
  $region4: #{nonlocal_block_2d.1} parent=0 // loop_header_branch
    %14 = sbr.rel (%p12) target = $region8
  $region5: #{nonlocal_block_2d.1} parent=0 // loop_body
    %s16 = ssub.s32 %s11, 1
    %s17 = ssub.s32 %s11, 2
    %s18 = sadd.s32 %s11, 1
    %s19 = ssub.s32 %s11, %s18
    %p20 = scmp.eq.s32.totalorder %s19, 0
    %s22 = sadd.s32 %s21, 1
    %s23 = scalar_select %p20, %s21, %s22
    %p26 = pneg %p20
    %p27 = scmp.eq.s32.totalorder %s11, 1
    %p28 = por %p26, %p27
    %p29 = scmp.ne.s32.totalorder %s21, %s24
    %p30 = scmp.eq.s32.totalorder %s11, 0
    %p31 = por %p29, %p30
    %p32 = scmp.ne.s32.totalorder %s21, %s24
    %p33 = scmp.eq.s32.totalorder %s16, 1
    %p34 = por %p32, %p33
    %p35 = scmp.ne.s32.totalorder %s24, %s25
    %p36 = scmp.eq.s32.totalorder %s16, 0
    %p37 = por %p35, %p36
    %p38 = scmp.ne.s32.totalorder %s24, %s25
    %p39 = scmp.eq.s32.totalorder %s17, 1
    %p40 = por %p38, %p39
    %p42 = scmp.ne.s32.totalorder %s25, %s41
    %p43 = scmp.eq.s32.totalorder %s17, 0
    %p44 = por %p42, %p43
    %s46 = sadd.s32 %s45, 1
    %p49 = scmp.eq.s32.totalorder %s11, 1
    %p50 = scmp.ne.s32.totalorder %s45, %s47
    %p51 = scmp.eq.s32.totalorder %s11, 0
    %p52 = por %p50, %p51
    %p53 = scmp.ne.s32.totalorder %s45, %s47
    %p54 = scmp.eq.s32.totalorder %s16, 1
    %p55 = por %p53, %p54
    %p56 = scmp.ne.s32.totalorder %s47, %s48
    %p57 = scmp.eq.s32.totalorder %s16, 0
    %p58 = por %p56, %p57
    %p59 = scmp.ne.s32.totalorder %s47, %s48
    %p60 = scmp.eq.s32.totalorder %s17, 1
    %p61 = por %p59, %p60
    %p63 = scmp.ne.s32.totalorder %s48, %s62
    %p64 = scmp.eq.s32.totalorder %s17, 0
    %p65 = por %p63, %p64
    %s67 = sadd.s32 %s66, 1
    %p70 = scmp.eq.s32.totalorder %s11, 1
    %p71 = scmp.ne.s32.totalorder %s66, %s68
    %p72 = scmp.eq.s32.totalorder %s11, 0
    %p73 = por %p71, %p72
    %p74 = scmp.ne.s32.totalorder %s66, %s68
    %p75 = scmp.eq.s32.totalorder %s16, 1
    %p76 = por %p74, %p75
    %p77 = scmp.ne.s32.totalorder %s68, %s69
    %p78 = scmp.eq.s32.totalorder %s16, 0
    %p79 = por %p77, %p78
    %p80 = scmp.ne.s32.totalorder %s68, %s69
    %p81 = scmp.eq.s32.totalorder %s17, 1
    %p82 = por %p80, %p81
    %p84 = scmp.ne.s32.totalorder %s69, %s83
    %p85 = scmp.eq.s32.totalorder %s17, 0
    %p86 = por %p84, %p85
    %s88 = sadd.s32 %s87, 1
    %p91 = scmp.eq.s32.totalorder %s11, 1
    %p92 = scmp.ne.s32.totalorder %s87, %s89
    %p93 = scmp.eq.s32.totalorder %s11, 0
    %p94 = por %p92, %p93
    %p95 = scmp.ne.s32.totalorder %s87, %s89
    %p96 = scmp.eq.s32.totalorder %s16, 1
    %p97 = por %p95, %p96
    %p98 = scmp.ne.s32.totalorder %s89, %s90
    %p99 = scmp.eq.s32.totalorder %s16, 0
    %p100 = por %p98, %p99
    %p101 = scmp.ne.s32.totalorder %s89, %s90
    %p102 = scmp.eq.s32.totalorder %s17, 1
    %p103 = por %p101, %p102
    %p105 = scmp.ne.s32.totalorder %s90, %s104
    %p106 = scmp.eq.s32.totalorder %s17, 0
    %p107 = por %p105, %p106
    %s109 = sadd.s32 %s108, 1
    %p112 = scmp.eq.s32.totalorder %s11, 1
    %p113 = scmp.ne.s32.totalorder %s108, %s110
    %p114 = scmp.eq.s32.totalorder %s11, 0
    %p115 = por %p113, %p114
    %p116 = scmp.ne.s32.totalorder %s108, %s110
    %p117 = scmp.eq.s32.totalorder %s16, 1
    %p118 = por %p116, %p117
    %p119 = scmp.ne.s32.totalorder %s110, %s111
    %p120 = scmp.eq.s32.totalorder %s16, 0
    %p121 = por %p119, %p120
    %p122 = scmp.ne.s32.totalorder %s110, %s111
    %p123 = scmp.eq.s32.totalorder %s17, 1
    %p124 = por %p122, %p123
    %p126 = scmp.ne.s32.totalorder %s111, %s125
    %p127 = scmp.eq.s32.totalorder %s17, 0
    %p128 = por %p126, %p127
    %s129 = ssub.s32 %s11, %s18
    %p130 = scmp.eq.s32.totalorder %s129, 0
    %s132 = sadd.s32 %s131, 1
    %s133 = scalar_select %p130, %s131, %s132
    %p136 = pneg %p130
    %p137 = scmp.eq.s32.totalorder %s11, 1
    %p138 = por %p136, %p137
    %p139 = scmp.ne.s32.totalorder %s131, %s134
    %p140 = scmp.eq.s32.totalorder %s11, 0
    %p141 = por %p139, %p140
    %p142 = scmp.ne.s32.totalorder %s131, %s134
    %p143 = scmp.eq.s32.totalorder %s16, 1
    %p144 = por %p142, %p143
    %p145 = scmp.ne.s32.totalorder %s134, %s135
    %p146 = scmp.eq.s32.totalorder %s16, 0
    %p147 = por %p145, %p146
    %p148 = scmp.ne.s32.totalorder %s134, %s135
    %p149 = scmp.eq.s32.totalorder %s17, 1
    %p150 = por %p148, %p149
    %p152 = scmp.ne.s32.totalorder %s135, %s151
    %p153 = scmp.eq.s32.totalorder %s17, 0
    %p154 = por %p152, %p153
    %p155 = scmp.le.s32.totalorder 1, %s11
    %p156 = scmp.lt.s32.totalorder %s11, 3
    %p157 = pnand %p155, %p156
    %p158 = pneg %p157
    // Predicated region
    $region9: #{nonlocal_block_2d.1} parent=5 // pred_check
      _
    $region10: #{nonlocal_block_2d.1} parent=5 // pred_check_branch
      %160 = sbr.rel (%p157) target = $region12
    $region11: #{nonlocal_block_2d.1} parent=5 // pred_region
      %s161 = ssub.s32 %s11, 1
      // Predicated region
      $region13: #{nonlocal_block_2d.1} parent=11 // pred_check
        %p162 = pneg %p58
      $region14: #{nonlocal_block_2d.1} parent=11 // pred_check_branch
        %164 = sbr.rel (%p162) target = $region16
      $region15: #{nonlocal_block_2d.1} parent=11 // pred_region
        _
      $region16: #{nonlocal_block_2d.1} parent=11 // pred_fallthru
        _
      // Predicated region
      $region17: #{nonlocal_block_2d.1} parent=11 // pred_check
        %p165 = pneg %p79
      $region18: #{nonlocal_block_2d.1} parent=11 // pred_check_branch
        %167 = sbr.rel (%p165) target = $region20
      $region19: #{nonlocal_block_2d.1} parent=11 // pred_region
        _
      $region20: #{nonlocal_block_2d.1} parent=11 // pred_fallthru
        _
      // Predicated region
      $region21: #{nonlocal_block_2d.1} parent=11 // pred_check
        %p168 = pneg %p100
      $region22: #{nonlocal_block_2d.1} parent=11 // pred_check_branch
        %170 = sbr.rel (%p168) target = $region24
      $region23: #{nonlocal_block_2d.1} parent=11 // pred_region
        _
      $region24: #{nonlocal_block_2d.1} parent=11 // pred_fallthru
        _
      // Predicated region
      $region25: #{nonlocal_block_2d.1} parent=11 // pred_check
        %p171 = pneg %p121
      $region26: #{nonlocal_block_2d.1} parent=11 // pred_check_branch
        %173 = sbr.rel (%p171) target = $region28
      $region27: #{nonlocal_block_2d.1} parent=11 // pred_region
        _
      $region28: #{nonlocal_block_2d.1} parent=11 // pred_fallthru
        _
    $region12: #{nonlocal_block_2d.1} parent=5 // pred_fallthru
      _
    %p174 = scmp.lt.s32.totalorder %s11, 2
    // Predicated region
    $region29: #{nonlocal_block_2d.1} parent=5 // pred_check
      %p175 = pneg %p174
    $region30: #{nonlocal_block_2d.1} parent=5 // pred_check_branch
      %177 = sbr.rel (%p175) target = $region32
    $region31: #{nonlocal_block_2d.1} parent=5 // pred_region
      // Predicated region
      $region33: #{nonlocal_block_2d.1} parent=31 // pred_check
        %p178 = pneg %p31
      $region34: #{nonlocal_block_2d.1} parent=31 // pred_check_branch
        %180 = sbr.rel (%p178) target = $region36
      $region35: #{nonlocal_block_2d.1} parent=31 // pred_region
        %p181 = scmp.lt.s32.totalorder %s11, 1
        %s182 = scalar_select %p181, %s11, 1
        %s183 = smul.addr %s182, 8
        %s184 = smul.addr %s183, 8
        %s185 = scalar_lea.vmem %s0, %s184
      $region36: #{nonlocal_block_2d.1} parent=31 // pred_fallthru
        _
    $region32: #{nonlocal_block_2d.1} parent=5 // pred_fallthru
      _
    %p186 = scmp.le.s32.totalorder 1, %s11
    %p187 = scmp.lt.s32.totalorder %s11, 3
    %p188 = pnand %p186, %p187
    %p189 = pneg %p188
    // Predicated region
    $region37: #{nonlocal_block_2d.1} parent=5 // pred_check
      _
    $region38: #{nonlocal_block_2d.1} parent=5 // pred_check_branch
      %191 = sbr.rel (%p188) target = $region40
    $region39: #{nonlocal_block_2d.1} parent=5 // pred_region
      %s192 = ssub.s32 %s11, 1
      %p193 = scmp.lt.s32.totalorder %s16, 1
      %s194 = scalar_select %p193, %s16, 1
      %s195 = smul.addr %s194, 8
      %s196 = smul.addr %s195, 8
      %s197 = scalar_lea.vmem %s0, %s196
      %p198 = pneg %p37
      %p199 = pneg %p34
      %p200 = pneg %p58
      %p201 = pneg %p55
      %p202 = pneg %p79
      %p203 = pneg %p76
      %p204 = pneg %p100
      %p205 = pneg %p97
      %p206 = pneg %p121
      %p207 = pneg %p118
      %p208 = pneg %p147
      %p209 = pneg %p144
      %p210 = scmp.lt.s32.totalorder %s16, 1
      %s211 = scalar_select %p210, %s16, 1
      %s212 = smul.addr %s211, 8
      %s213 = smul.addr %s212, 8
      %s214 = scalar_lea.vmem %s5, %s213
      %p215 = scmp.lt.s32.totalorder %s16, 1
      %s216 = scalar_select %p215, %s16, 1
      %s217 = smul.addr %s216, 8
      %s218 = smul.addr %s217, 8
      %s219 = scalar_lea.vmem %s0, %s218
      %p220 = scmp.lt.s32.totalorder %s16, 1
      %s221 = scalar_select %p220, %s16, 1
      %s222 = smul.addr %s221, 8
      %s223 = smul.addr %s222, 8
      %s224 = scalar_lea.vmem %s5, %s223
      %v225 = vld [vmem:[%s219] sm:$0xff]
      %v226 = vld [vmem:[%s219 + $0x8] sm:$0xff]
      %v227 = vld [vmem:[%s219 + $0x10] sm:$0xff]
      %v228 = vld [vmem:[%s219 + $0x18] sm:$0xff]
      %v229 = vld [vmem:[%s219 + $0x20] sm:$0xff]
      %v230 = vld [vmem:[%s219 + $0x28] sm:$0xff]
      %v231 = vld [vmem:[%s219 + $0x30] sm:$0xff]
      %v232 = vld [vmem:[%s219 + $0x38] sm:$0xff]
      %v233 = vld [vmem:[%s1] sm:$0xff]
      %v234 = vld [vmem:[%s1 + $0x8] sm:$0xff]
      %v235 = vld [vmem:[%s1 + $0x10] sm:$0xff]
      %v236 = vld [vmem:[%s1 + $0x18] sm:$0xff]
      %v237 = vld [vmem:[%s1 + $0x20] sm:$0xff]
      %v238 = vld [vmem:[%s1 + $0x28] sm:$0xff]
      %v239 = vld [vmem:[%s2] sm:$0xff]
      %v240 = vld [vmem:[%s2 + $0x8] sm:$0xff]
      %v241 = vld [vmem:[%s2 + $0x10] sm:$0xff]
      %v242 = vld [vmem:[%s2 + $0x18] sm:$0xff]
      %v243 = vld [vmem:[%s2 + $0x20] sm:$0xff]
      %v244 = vld [vmem:[%s2 + $0x28] sm:$0xff]
      %246 = vset.pattern.permute.xlu0 0
      %247 = vperm.xlu0 %246, %v239
      %v248 = vpop.permute.xlu0 %247
      %251 = vset.pattern.permute.xlu0 0
      %252 = vperm.xlu0 %251, %v240
      %v253 = vpop.permute.xlu0 %252
      %256 = vset.pattern.permute.xlu0 0
      %257 = vperm.xlu0 %256, %v241
      %v258 = vpop.permute.xlu0 %257
      %261 = vset.pattern.permute.xlu0 0
      %262 = vperm.xlu0 %261, %v242
      %v263 = vpop.permute.xlu0 %262
      %266 = vset.pattern.permute.xlu0 0
      %267 = vperm.xlu0 %266, %v243
      %v268 = vpop.permute.xlu0 %267
      %271 = vset.pattern.permute.xlu0 0
      %272 = vperm.xlu0 %271, %v244
      %v273 = vpop.permute.xlu0 %272
      %vm275 = vcmask 261120
      %v277 = vsel %vm275, %v233, 0
      %v280 = vsel %vm275, %v234, 0
      %v283 = vsel %vm275, %v235, 0
      %v286 = vsel %vm275, %v236, 0
      %v289 = vsel %vm275, %v237, 0
      %v292 = vsel %vm275, %v238, 0
      %294 = vmatpush.msra.mxu0 0.0
      %295 = vmatpush.msra.mxu0 0.0
      %296 = vmatpush.msra.mxu0 0.0
      %297 = vmatpush.msra.mxu0 0.0
      %298 = vmatpush.msra.mxu0 0.0
      %299 = vmatpush.msra.mxu0 0.0
      %300 = vmatpush.msra.mxu0 0.0
      %301 = vmatpush.msra.mxu0 0.0
      %302 = vmatpush.msra.mxu0 0.0
      %303 = vmatpush.msra.mxu0 0.0
      %304 = vmatpush.msra.mxu0 0.0
      %305 = vmatpush.msra.mxu0 0.0
      %306 = vmatpush.msra.mxu0 %v231
      %307 = vmatpush.msra.mxu0 %v229
      %308 = vmatpush.msra.mxu0 %v227
      %309 = vmatpush.msra.mxu0 %v225
      %310 = vmatmul.f32.gmra.mxu0 %v277
      %v311 = vpop.f32.mrf.mxu0
      %v312 = vadd.f32 %v248, %v311
      %313 = vmatmul.f32.gmra.mxu0 %v280
      %v314 = vpop.f32.mrf.mxu0
      %v315 = vadd.f32 %v253, %v314
      %316 = vmatmul.f32.gmra.mxu0 %v283
      %v317 = vpop.f32.mrf.mxu0
      %v318 = vadd.f32 %v258, %v317
      %319 = vmatmul.f32.gmra.mxu0 %v286
      %v320 = vpop.f32.mrf.mxu0
      %v321 = vadd.f32 %v263, %v320
      %322 = vmatmul.f32.gmra.mxu0 %v289
      %v323 = vpop.f32.mrf.mxu0
      %v324 = vadd.f32 %v268, %v323
      %325 = vmatmul.f32.gmra.mxu0 %v292
      %v326 = vpop.f32.mrf.mxu0
      %v327 = vadd.f32 %v273, %v326
      %328 = vdwg.mxu0
      %329 = vmatpush.msra.mxu0 0.0
      %330 = vmatpush.msra.mxu0 0.0
      %331 = vmatpush.msra.mxu0 0.0
      %332 = vmatpush.msra.mxu0 0.0
      %333 = vmatpush.msra.mxu0 0.0
      %334 = vmatpush.msra.mxu0 0.0
      %335 = vmatpush.msra.mxu0 0.0
      %336 = vmatpush.msra.mxu0 0.0
      %337 = vmatpush.msra.mxu0 0.0
      %338 = vmatpush.msra.mxu0 0.0
      %339 = vmatpush.msra.mxu0 0.0
      %340 = vmatpush.msra.mxu0 0.0
      %341 = vmatpush.msra.mxu0 %v232
      %342 = vmatpush.msra.mxu0 %v230
      %343 = vmatpush.msra.mxu0 %v228
      %344 = vmatpush.msra.mxu0 %v226
      %345 = vmatmul.f32.gmra.mxu0 %v277
      %v346 = vpop.f32.mrf.mxu0
      %v347 = vadd.f32 %v248, %v346
      %348 = vmatmul.f32.gmra.mxu0 %v280
      %v349 = vpop.f32.mrf.mxu0
      %v350 = vadd.f32 %v253, %v349
      %351 = vmatmul.f32.gmra.mxu0 %v283
      %v352 = vpop.f32.mrf.mxu0
      %v353 = vadd.f32 %v258, %v352
      %354 = vmatmul.f32.gmra.mxu0 %v286
      %v355 = vpop.f32.mrf.mxu0
      %v356 = vadd.f32 %v263, %v355
      %357 = vmatmul.f32.gmra.mxu0 %v289
      %v358 = vpop.f32.mrf.mxu0
      %v359 = vadd.f32 %v268, %v358
      %360 = vmatmul.f32.gmra.mxu0 %v292
      %v361 = vpop.f32.mrf.mxu0
      %v362 = vadd.f32 %v273, %v361
      %363 = vdwg.mxu0
      %364 = vxpose.xlu0.b32.start [1/16] %v318, 128
      %365 = vxpose.xlu0.b32.cont [2/16] %v321, 128
      %366 = vxpose.xlu0.b32.cont [3/16] 0.0, 128
      %367 = vxpose.xlu0.b32.cont [4/16] 0.0, 128
      %368 = vxpose.xlu0.b32.cont [5/16] 0.0, 128
      %369 = vxpose.xlu0.b32.cont [6/16] 0.0, 128
      %370 = vxpose.xlu0.b32.cont [7/16] 0.0, 128
      %371 = vxpose.xlu0.b32.cont [8/16] 0.0, 128
      %372 = vxpose.xlu0.b32.cont [9/16] 0.0, 128
      %373 = vxpose.xlu0.b32.cont [10/16] 0.0, 128
      %374 = vxpose.xlu0.b32.cont [11/16] 0.0, 128
      %375 = vxpose.xlu0.b32.cont [12/16] 0.0, 128
      %376 = vxpose.xlu0.b32.cont [13/16] 0.0, 128
      %377 = vxpose.xlu0.b32.cont [14/16] 0.0, 128
      %378 = vxpose.xlu0.b32.cont [15/16] 0.0, 128
      %379 = vxpose.xlu0.b32.end [16/16] 0.0, 128
      %v380 = vpop.trf.xlu0
      %v381 = vpop.trf.xlu0
      %v382 = vpop.trf.xlu0
      %v383 = vpop.trf.xlu0
      %v384 = vpop.trf.xlu0
      %v385 = vpop.trf.xlu0
      %v386 = vpop.trf.xlu0
      %v387 = vpop.trf.xlu0
      %v388 = vpop.trf.xlu0
      %v389 = vpop.trf.xlu0
      %v390 = vpop.trf.xlu0
      %v391 = vpop.trf.xlu0
      %v392 = vpop.trf.xlu0
      %v393 = vpop.trf.xlu0
      %v394 = vpop.trf.xlu0
      %v395 = vpop.trf.xlu0
      %396 = vxpose.xlu0.b32.start [1/16] %v353, 128
      %397 = vxpose.xlu0.b32.cont [2/16] %v356, 128
      %398 = vxpose.xlu0.b32.cont [3/16] 0.0, 128
      %399 = vxpose.xlu0.b32.cont [4/16] 0.0, 128
      %400 = vxpose.xlu0.b32.cont [5/16] 0.0, 128
      %401 = vxpose.xlu0.b32.cont [6/16] 0.0, 128
      %402 = vxpose.xlu0.b32.cont [7/16] 0.0, 128
      %403 = vxpose.xlu0.b32.cont [8/16] 0.0, 128
      %404 = vxpose.xlu0.b32.cont [9/16] 0.0, 128
      %405 = vxpose.xlu0.b32.cont [10/16] 0.0, 128
      %406 = vxpose.xlu0.b32.cont [11/16] 0.0, 128
      %407 = vxpose.xlu0.b32.cont [12/16] 0.0, 128
      %408 = vxpose.xlu0.b32.cont [13/16] 0.0, 128
      %409 = vxpose.xlu0.b32.cont [14/16] 0.0, 128
      %410 = vxpose.xlu0.b32.cont [15/16] 0.0, 128
      %411 = vxpose.xlu0.b32.end [16/16] 0.0, 128
      %v412 = vpop.trf.xlu0
      %v413 = vpop.trf.xlu0
      %v414 = vpop.trf.xlu0
      %v415 = vpop.trf.xlu0
      %v416 = vpop.trf.xlu0
      %v417 = vpop.trf.xlu0
      %v418 = vpop.trf.xlu0
      %v419 = vpop.trf.xlu0
      %v420 = vpop.trf.xlu0
      %v421 = vpop.trf.xlu0
      %v422 = vpop.trf.xlu0
      %v423 = vpop.trf.xlu0
      %v424 = vpop.trf.xlu0
      %v425 = vpop.trf.xlu0
      %v426 = vpop.trf.xlu0
      %v427 = vpop.trf.xlu0
      %vm428 = vcmask 130048
      %v430 = vsel %vm428, %v380, 0
      %v433 = vsel %vm428, %v381, 0
      %v436 = vsel %vm428, %v382, 0
      %v439 = vsel %vm428, %v383, 0
      %v442 = vsel %vm428, %v384, 0
      %v445 = vsel %vm428, %v385, 0
      %v448 = vsel %vm428, %v386, 0
      %v451 = vsel %vm428, %v387, 0
      %v454 = vsel %vm428, %v388, 0
      %v457 = vsel %vm428, %v389, 0
      %v460 = vsel %vm428, %v390, 0
      %v463 = vsel %vm428, %v391, 0
      %v466 = vsel %vm428, %v392, 0
      %v469 = vsel %vm428, %v393, 0
      %v472 = vsel %vm428, %v394, 0
      %v475 = vsel %vm428, %v395, 0
      %v478 = vsel %vm428, %v412, 0
      %v481 = vsel %vm428, %v413, 0
      %v484 = vsel %vm428, %v414, 0
      %v487 = vsel %vm428, %v415, 0
      %v490 = vsel %vm428, %v416, 0
      %v493 = vsel %vm428, %v417, 0
      %v496 = vsel %vm428, %v418, 0
      %v499 = vsel %vm428, %v419, 0
      %v502 = vsel %vm428, %v420, 0
      %v505 = vsel %vm428, %v421, 0
      %v508 = vsel %vm428, %v422, 0
      %v511 = vsel %vm428, %v423, 0
      %v514 = vsel %vm428, %v424, 0
      %v517 = vsel %vm428, %v425, 0
      %v520 = vsel %vm428, %v426, 0
      %v523 = vsel %vm428, %v427, 0
      %525 = vmatpush.msra.mxu0 0.0
      %526 = vmatpush.msra.mxu0 0.0
      %527 = vmatpush.msra.mxu0 0.0
      %528 = vmatpush.msra.mxu0 0.0
      %529 = vmatpush.msra.mxu0 0.0
      %530 = vmatpush.msra.mxu0 0.0
      %531 = vmatpush.msra.mxu0 0.0
      %532 = vmatpush.msra.mxu0 0.0
      %533 = vmatpush.msra.mxu0 0.0
      %534 = vmatpush.msra.mxu0 0.0
      %535 = vmatpush.msra.mxu0 0.0
      %536 = vmatpush.msra.mxu0 0.0
      %537 = vmatpush.msra.mxu0 0.0
      %538 = vmatpush.msra.mxu0 0.0
      %539 = vmatpush.msra.mxu0 %v315
      %540 = vmatpush.msra.mxu0 %v312
      %541 = vmatmul.f32.gmra.mxu0 %v430
      %v542 = vpop.f32.mrf.mxu0
      %v543 = vadd.f32 0.0, %v542
      %544 = vmatmul.f32.gmra.mxu0 %v433
      %v545 = vpop.f32.mrf.mxu0
      %v546 = vadd.f32 0.0, %v545
      %547 = vmatmul.f32.gmra.mxu0 %v436
      %v548 = vpop.f32.mrf.mxu0
      %v549 = vadd.f32 0.0, %v548
      %550 = vmatmul.f32.gmra.mxu0 %v439
      %v551 = vpop.f32.mrf.mxu0
      %v552 = vadd.f32 0.0, %v551
      %553 = vmatmul.f32.gmra.mxu0 %v442
      %v554 = vpop.f32.mrf.mxu0
      %v555 = vadd.f32 0.0, %v554
      %556 = vmatmul.f32.gmra.mxu0 %v445
      %v557 = vpop.f32.mrf.mxu0
      %v558 = vadd.f32 0.0, %v557
      %559 = vmatmul.f32.gmra.mxu0 %v448
      %v560 = vpop.f32.mrf.mxu0
      %v561 = vadd.f32 0.0, %v560
      %562 = vmatmul.f32.gmra.mxu0 %v451
      %v563 = vpop.f32.mrf.mxu0
      %v564 = vadd.f32 0.0, %v563
      %565 = vmatmul.f32.gmra.mxu0 %v454
      %v566 = vpop.f32.mrf.mxu0
      %v567 = vadd.f32 0.0, %v566
      %568 = vmatmul.f32.gmra.mxu0 %v457
      %v569 = vpop.f32.mrf.mxu0
      %v570 = vadd.f32 0.0, %v569
      %571 = vmatmul.f32.gmra.mxu0 %v460
      %v572 = vpop.f32.mrf.mxu0
      %v573 = vadd.f32 0.0, %v572
      %574 = vmatmul.f32.gmra.mxu0 %v463
      %v575 = vpop.f32.mrf.mxu0
      %v576 = vadd.f32 0.0, %v575
      %577 = vmatmul.f32.gmra.mxu0 %v466
      %v578 = vpop.f32.mrf.mxu0
      %v579 = vadd.f32 0.0, %v578
      %580 = vmatmul.f32.gmra.mxu0 %v469
      %v581 = vpop.f32.mrf.mxu0
      %v582 = vadd.f32 0.0, %v581
      %583 = vmatmul.f32.gmra.mxu0 %v472
      %v584 = vpop.f32.mrf.mxu0
      %v585 = vadd.f32 0.0, %v584
      %586 = vmatmul.f32.gmra.mxu0 %v475
      %v587 = vpop.f32.mrf.mxu0
      %v588 = vadd.f32 0.0, %v587
      %589 = vmatmul.f32.gmra.mxu0 %v478
      %v590 = vpop.f32.mrf.mxu0
      %v591 = vadd.f32 0.0, %v590
      %592 = vmatmul.f32.gmra.mxu0 %v481
      %v593 = vpop.f32.mrf.mxu0
      %v594 = vadd.f32 0.0, %v593
      %595 = vmatmul.f32.gmra.mxu0 %v484
      %v596 = vpop.f32.mrf.mxu0
      %v597 = vadd.f32 0.0, %v596
      %598 = vmatmul.f32.gmra.mxu0 %v487
      %v599 = vpop.f32.mrf.mxu0
      %v600 = vadd.f32 0.0, %v599
      %601 = vmatmul.f32.gmra.mxu0 %v490
      %v602 = vpop.f32.mrf.mxu0
      %v603 = vadd.f32 0.0, %v602
      %604 = vmatmul.f32.gmra.mxu0 %v493
      %v605 = vpop.f32.mrf.mxu0
      %v606 = vadd.f32 0.0, %v605
      %607 = vmatmul.f32.gmra.mxu0 %v496
      %v608 = vpop.f32.mrf.mxu0
      %v609 = vadd.f32 0.0, %v608
      %610 = vmatmul.f32.gmra.mxu0 %v499
      %v611 = vpop.f32.mrf.mxu0
      %v612 = vadd.f32 0.0, %v611
      %613 = vmatmul.f32.gmra.mxu0 %v502
      %v614 = vpop.f32.mrf.mxu0
      %v615 = vadd.f32 0.0, %v614
      %616 = vmatmul.f32.gmra.mxu0 %v505
      %v617 = vpop.f32.mrf.mxu0
      %v618 = vadd.f32 0.0, %v617
      %619 = vmatmul.f32.gmra.mxu0 %v508
      %v620 = vpop.f32.mrf.mxu0
      %v621 = vadd.f32 0.0, %v620
      %622 = vmatmul.f32.gmra.mxu0 %v511
      %v623 = vpop.f32.mrf.mxu0
      %v624 = vadd.f32 0.0, %v623
      %625 = vmatmul.f32.gmra.mxu0 %v514
      %v626 = vpop.f32.mrf.mxu0
      %v627 = vadd.f32 0.0, %v626
      %628 = vmatmul.f32.gmra.mxu0 %v517
      %v629 = vpop.f32.mrf.mxu0
      %v630 = vadd.f32 0.0, %v629
      %631 = vmatmul.f32.gmra.mxu0 %v520
      %v632 = vpop.f32.mrf.mxu0
      %v633 = vadd.f32 0.0, %v632
      %634 = vmatmul.f32.gmra.mxu0 %v523
      %v635 = vpop.f32.mrf.mxu0
      %v636 = vadd.f32 0.0, %v635
      %637 = vdwg.mxu0
      %638 = vmatpush.msra.mxu0 0.0
      %639 = vmatpush.msra.mxu0 0.0
      %640 = vmatpush.msra.mxu0 0.0
      %641 = vmatpush.msra.mxu0 0.0
      %642 = vmatpush.msra.mxu0 0.0
      %643 = vmatpush.msra.mxu0 0.0
      %644 = vmatpush.msra.mxu0 0.0
      %645 = vmatpush.msra.mxu0 0.0
      %646 = vmatpush.msra.mxu0 0.0
      %647 = vmatpush.msra.mxu0 0.0
      %648 = vmatpush.msra.mxu0 0.0
      %649 = vmatpush.msra.mxu0 0.0
      %650 = vmatpush.msra.mxu0 0.0
      %651 = vmatpush.msra.mxu0 0.0
      %652 = vmatpush.msra.mxu0 %v350
      %653 = vmatpush.msra.mxu0 %v347
      %654 = vmatmul.f32.gmra.mxu0 %v430
      %v655 = vpop.f32.mrf.mxu0
      %v656 = vadd.f32 0.0, %v655
      %657 = vmatmul.f32.gmra.mxu0 %v433
      %v658 = vpop.f32.mrf.mxu0
      %v659 = vadd.f32 0.0, %v658
      %660 = vmatmul.f32.gmra.mxu0 %v436
      %v661 = vpop.f32.mrf.mxu0
      %v662 = vadd.f32 0.0, %v661
      %663 = vmatmul.f32.gmra.mxu0 %v439
      %v664 = vpop.f32.mrf.mxu0
      %v665 = vadd.f32 0.0, %v664
      %666 = vmatmul.f32.gmra.mxu0 %v442
      %v667 = vpop.f32.mrf.mxu0
      %v668 = vadd.f32 0.0, %v667
      %669 = vmatmul.f32.gmra.mxu0 %v445
      %v670 = vpop.f32.mrf.mxu0
      %v671 = vadd.f32 0.0, %v670
      %672 = vmatmul.f32.gmra.mxu0 %v448
      %v673 = vpop.f32.mrf.mxu0
      %v674 = vadd.f32 0.0, %v673
      %675 = vmatmul.f32.gmra.mxu0 %v451
      %v676 = vpop.f32.mrf.mxu0
      %v677 = vadd.f32 0.0, %v676
      %678 = vmatmul.f32.gmra.mxu0 %v454
      %v679 = vpop.f32.mrf.mxu0
      %v680 = vadd.f32 0.0, %v679
      %681 = vmatmul.f32.gmra.mxu0 %v457
      %v682 = vpop.f32.mrf.mxu0
      %v683 = vadd.f32 0.0, %v682
      %684 = vmatmul.f32.gmra.mxu0 %v460
      %v685 = vpop.f32.mrf.mxu0
      %v686 = vadd.f32 0.0, %v685
      %687 = vmatmul.f32.gmra.mxu0 %v463
      %v688 = vpop.f32.mrf.mxu0
      %v689 = vadd.f32 0.0, %v688
      %690 = vmatmul.f32.gmra.mxu0 %v466
      %v691 = vpop.f32.mrf.mxu0
      %v692 = vadd.f32 0.0, %v691
      %693 = vmatmul.f32.gmra.mxu0 %v469
      %v694 = vpop.f32.mrf.mxu0
      %v695 = vadd.f32 0.0, %v694
      %696 = vmatmul.f32.gmra.mxu0 %v472
      %v697 = vpop.f32.mrf.mxu0
      %v698 = vadd.f32 0.0, %v697
      %699 = vmatmul.f32.gmra.mxu0 %v475
      %v700 = vpop.f32.mrf.mxu0
      %v701 = vadd.f32 0.0, %v700
      %702 = vmatmul.f32.gmra.mxu0 %v478
      %v703 = vpop.f32.mrf.mxu0
      %v704 = vadd.f32 0.0, %v703
      %705 = vmatmul.f32.gmra.mxu0 %v481
      %v706 = vpop.f32.mrf.mxu0
      %v707 = vadd.f32 0.0, %v706
      %708 = vmatmul.f32.gmra.mxu0 %v484
      %v709 = vpop.f32.mrf.mxu0
      %v710 = vadd.f32 0.0, %v709
      %711 = vmatmul.f32.gmra.mxu0 %v487
      %v712 = vpop.f32.mrf.mxu0
      %v713 = vadd.f32 0.0, %v712
      %714 = vmatmul.f32.gmra.mxu0 %v490
      %v715 = vpop.f32.mrf.mxu0
      %v716 = vadd.f32 0.0, %v715
      %717 = vmatmul.f32.gmra.mxu0 %v493
      %v718 = vpop.f32.mrf.mxu0
      %v719 = vadd.f32 0.0, %v718
      %720 = vmatmul.f32.gmra.mxu0 %v496
      %v721 = vpop.f32.mrf.mxu0
      %v722 = vadd.f32 0.0, %v721
      %723 = vmatmul.f32.gmra.mxu0 %v499
      %v724 = vpop.f32.mrf.mxu0
      %v725 = vadd.f32 0.0, %v724
      %726 = vmatmul.f32.gmra.mxu0 %v502
      %v727 = vpop.f32.mrf.mxu0
      %v728 = vadd.f32 0.0, %v727
      %729 = vmatmul.f32.gmra.mxu0 %v505
      %v730 = vpop.f32.mrf.mxu0
      %v731 = vadd.f32 0.0, %v730
      %732 = vmatmul.f32.gmra.mxu0 %v508
      %v733 = vpop.f32.mrf.mxu0
      %v734 = vadd.f32 0.0, %v733
      %735 = vmatmul.f32.gmra.mxu0 %v511
      %v736 = vpop.f32.mrf.mxu0
      %v737 = vadd.f32 0.0, %v736
      %738 = vmatmul.f32.gmra.mxu0 %v514
      %v739 = vpop.f32.mrf.mxu0
      %v740 = vadd.f32 0.0, %v739
      %741 = vmatmul.f32.gmra.mxu0 %v517
      %v742 = vpop.f32.mrf.mxu0
      %v743 = vadd.f32 0.0, %v742
      %744 = vmatmul.f32.gmra.mxu0 %v520
      %v745 = vpop.f32.mrf.mxu0
      %v746 = vadd.f32 0.0, %v745
      %747 = vmatmul.f32.gmra.mxu0 %v523
      %v748 = vpop.f32.mrf.mxu0
      %v749 = vadd.f32 0.0, %v748
      %750 = vdwg.mxu0
      %v751 = vmax.f32 %v543, %v656
      %752 = vmax.xlane.f32.xlu0 %v751
      %v753 = vpop.xlane.xlu0 %752
      %v754 = vmax.f32 %v546, %v659
      %755 = vmax.xlane.f32.xlu0 %v754
      %v756 = vpop.xlane.xlu0 %755
      %v757 = vmax.f32 %v549, %v662
      %758 = vmax.xlane.f32.xlu0 %v757
      %v759 = vpop.xlane.xlu0 %758
      %v760 = vmax.f32 %v552, %v665
      %761 = vmax.xlane.f32.xlu0 %v760
      %v762 = vpop.xlane.xlu0 %761
      %v763 = vmax.f32 %v555, %v668
      %764 = vmax.xlane.f32.xlu0 %v763
      %v765 = vpop.xlane.xlu0 %764
      %v766 = vmax.f32 %v558, %v671
      %767 = vmax.xlane.f32.xlu0 %v766
      %v768 = vpop.xlane.xlu0 %767
      %v769 = vmax.f32 %v561, %v674
      %770 = vmax.xlane.f32.xlu0 %v769
      %v771 = vpop.xlane.xlu0 %770
      %v772 = vmax.f32 %v564, %v677
      %773 = vmax.xlane.f32.xlu0 %v772
      %v774 = vpop.xlane.xlu0 %773
      %v775 = vmax.f32 %v567, %v680
      %776 = vmax.xlane.f32.xlu0 %v775
      %v777 = vpop.xlane.xlu0 %776
      %v778 = vmax.f32 %v570, %v683
      %779 = vmax.xlane.f32.xlu0 %v778
      %v780 = vpop.xlane.xlu0 %779
      %v781 = vmax.f32 %v573, %v686
      %782 = vmax.xlane.f32.xlu0 %v781
      %v783 = vpop.xlane.xlu0 %782
      %v784 = vmax.f32 %v576, %v689
      %785 = vmax.xlane.f32.xlu0 %v784
      %v786 = vpop.xlane.xlu0 %785
      %v787 = vmax.f32 %v579, %v692
      %788 = vmax.xlane.f32.xlu0 %v787
      %v789 = vpop.xlane.xlu0 %788
      %v790 = vmax.f32 %v582, %v695
      %791 = vmax.xlane.f32.xlu0 %v790
      %v792 = vpop.xlane.xlu0 %791
      %v793 = vmax.f32 %v585, %v698
      %794 = vmax.xlane.f32.xlu0 %v793
      %v795 = vpop.xlane.xlu0 %794
      %v796 = vmax.f32 %v588, %v701
      %797 = vmax.xlane.f32.xlu0 %v796
      %v798 = vpop.xlane.xlu0 %797
      %v799 = vmax.f32 %v591, %v704
      %800 = vmax.xlane.f32.xlu0 %v799
      %v801 = vpop.xlane.xlu0 %800
      %v802 = vmax.f32 %v594, %v707
      %803 = vmax.xlane.f32.xlu0 %v802
      %v804 = vpop.xlane.xlu0 %803
      %v805 = vmax.f32 %v597, %v710
      %806 = vmax.xlane.f32.xlu0 %v805
      %v807 = vpop.xlane.xlu0 %806
      %v808 = vmax.f32 %v600, %v713
      %809 = vmax.xlane.f32.xlu0 %v808
      %v810 = vpop.xlane.xlu0 %809
      %v811 = vmax.f32 %v603, %v716
      %812 = vmax.xlane.f32.xlu0 %v811
      %v813 = vpop.xlane.xlu0 %812
      %v814 = vmax.f32 %v606, %v719
      %815 = vmax.xlane.f32.xlu0 %v814
      %v816 = vpop.xlane.xlu0 %815
      %v817 = vmax.f32 %v609, %v722
      %818 = vmax.xlane.f32.xlu0 %v817
      %v819 = vpop.xlane.xlu0 %818
      %v820 = vmax.f32 %v612, %v725
      %821 = vmax.xlane.f32.xlu0 %v820
      %v822 = vpop.xlane.xlu0 %821
      %v823 = vmax.f32 %v615, %v728
      %824 = vmax.xlane.f32.xlu0 %v823
      %v825 = vpop.xlane.xlu0 %824
      %v826 = vmax.f32 %v618, %v731
      %827 = vmax.xlane.f32.xlu0 %v826
      %v828 = vpop.xlane.xlu0 %827
      %v829 = vmax.f32 %v621, %v734
      %830 = vmax.xlane.f32.xlu0 %v829
      %v831 = vpop.xlane.xlu0 %830
      %v832 = vmax.f32 %v624, %v737
      %833 = vmax.xlane.f32.xlu0 %v832
      %v834 = vpop.xlane.xlu0 %833
      %v835 = vmax.f32 %v627, %v740
      %836 = vmax.xlane.f32.xlu0 %v835
      %v837 = vpop.xlane.xlu0 %836
      %v838 = vmax.f32 %v630, %v743
      %839 = vmax.xlane.f32.xlu0 %v838
      %v840 = vpop.xlane.xlu0 %839
      %v841 = vmax.f32 %v633, %v746
      %842 = vmax.xlane.f32.xlu0 %v841
      %v843 = vpop.xlane.xlu0 %842
      %v844 = vmax.f32 %v636, %v749
      %845 = vmax.xlane.f32.xlu0 %v844
      %v846 = vpop.xlane.xlu0 %845
      %v847 = vsub.f32 %v543, %v753
      %v848 = vsub.f32 %v656, %v753
      %v849 = vsub.f32 %v546, %v756
      %v850 = vsub.f32 %v659, %v756
      %v851 = vsub.f32 %v549, %v759
      %v852 = vsub.f32 %v662, %v759
      %v853 = vsub.f32 %v552, %v762
      %v854 = vsub.f32 %v665, %v762
      %v855 = vsub.f32 %v555, %v765
      %v856 = vsub.f32 %v668, %v765
      %v857 = vsub.f32 %v558, %v768
      %v858 = vsub.f32 %v671, %v768
      %v859 = vsub.f32 %v561, %v771
      %v860 = vsub.f32 %v674, %v771
      %v861 = vsub.f32 %v564, %v774
      %v862 = vsub.f32 %v677, %v774
      %v863 = vsub.f32 %v567, %v777
      %v864 = vsub.f32 %v680, %v777
      %v865 = vsub.f32 %v570, %v780
      %v866 = vsub.f32 %v683, %v780
      %v867 = vsub.f32 %v573, %v783
      %v868 = vsub.f32 %v686, %v783
      %v869 = vsub.f32 %v576, %v786
      %v870 = vsub.f32 %v689, %v786
      %v871 = vsub.f32 %v579, %v789
      %v872 = vsub.f32 %v692, %v789
      %v873 = vsub.f32 %v582, %v792
      %v874 = vsub.f32 %v695, %v792
      %v875 = vsub.f32 %v585, %v795
      %v876 = vsub.f32 %v698, %v795
      %v877 = vsub.f32 %v588, %v798
      %v878 = vsub.f32 %v701, %v798
      %v879 = vsub.f32 %v591, %v801
      %v880 = vsub.f32 %v704, %v801
      %v881 = vsub.f32 %v594, %v804
      %v882 = vsub.f32 %v707, %v804
      %v883 = vsub.f32 %v597, %v807
      %v884 = vsub.f32 %v710, %v807
      %v885 = vsub.f32 %v600, %v810
      %v886 = vsub.f32 %v713, %v810
      %v887 = vsub.f32 %v603, %v813
      %v888 = vsub.f32 %v716, %v813
      %v889 = vsub.f32 %v606, %v816
      %v890 = vsub.f32 %v719, %v816
      %v891 = vsub.f32 %v609, %v819
      %v892 = vsub.f32 %v722, %v819
      %v893 = vsub.f32 %v612, %v822
      %v894 = vsub.f32 %v725, %v822
      %v895 = vsub.f32 %v615, %v825
      %v896 = vsub.f32 %v728, %v825
      %v897 = vsub.f32 %v618, %v828
      %v898 = vsub.f32 %v731, %v828
      %v899 = vsub.f32 %v621, %v831
      %v900 = vsub.f32 %v734, %v831
      %v901 = vsub.f32 %v624, %v834
      %v902 = vsub.f32 %v737, %v834
      %v903 = vsub.f32 %v627, %v837
      %v904 = vsub.f32 %v740, %v837
      %v905 = vsub.f32 %v630, %v840
      %v906 = vsub.f32 %v743, %v840
      %v907 = vsub.f32 %v633, %v843
      %v908 = vsub.f32 %v746, %v843
      %v909 = vsub.f32 %v636, %v846
      %v910 = vsub.f32 %v749, %v846
      %v911 = vmul.f32 %v847, 1.442695
      %v912 = vpow.pop %v911
      %v913 = vmul.f32 %v848, 1.442695
      %v914 = vpow.pop %v913
      %v915 = vmul.f32 %v849, 1.442695
      %v916 = vpow.pop %v915
      %v917 = vmul.f32 %v850, 1.442695
      %v918 = vpow.pop %v917
      %v919 = vmul.f32 %v851, 1.442695
      %v920 = vpow.pop %v919
      %v921 = vmul.f32 %v852, 1.442695
      %v922 = vpow.pop %v921
      %v923 = vmul.f32 %v853, 1.442695
      %v924 = vpow.pop %v923
      %v925 = vmul.f32 %v854, 1.442695
      %v926 = vpow.pop %v925
      %v927 = vmul.f32 %v855, 1.442695
      %v928 = vpow.pop %v927
      %v929 = vmul.f32 %v856, 1.442695
      %v930 = vpow.pop %v929
      %v931 = vmul.f32 %v857, 1.442695
      %v932 = vpow.pop %v931
      %v933 = vmul.f32 %v858, 1.442695
      %v934 = vpow.pop %v933
      %v935 = vmul.f32 %v859, 1.442695
      %v936 = vpow.pop %v935
      %v937 = vmul.f32 %v860, 1.442695
      %v938 = vpow.pop %v937
      %v939 = vmul.f32 %v861, 1.442695
      %v940 = vpow.pop %v939
      %v941 = vmul.f32 %v862, 1.442695
      %v942 = vpow.pop %v941
      %v943 = vmul.f32 %v863, 1.442695
      %v944 = vpow.pop %v943
      %v945 = vmul.f32 %v864, 1.442695
      %v946 = vpow.pop %v945
      %v947 = vmul.f32 %v865, 1.442695
      %v948 = vpow.pop %v947
      %v949 = vmul.f32 %v866, 1.442695
      %v950 = vpow.pop %v949
      %v951 = vmul.f32 %v867, 1.442695
      %v952 = vpow.pop %v951
      %v953 = vmul.f32 %v868, 1.442695
      %v954 = vpow.pop %v953
      %v955 = vmul.f32 %v869, 1.442695
      %v956 = vpow.pop %v955
      %v957 = vmul.f32 %v870, 1.442695
      %v958 = vpow.pop %v957
      %v959 = vmul.f32 %v871, 1.442695
      %v960 = vpow.pop %v959
      %v961 = vmul.f32 %v872, 1.442695
      %v962 = vpow.pop %v961
      %v963 = vmul.f32 %v873, 1.442695
      %v964 = vpow.pop %v963
      %v965 = vmul.f32 %v874, 1.442695
      %v966 = vpow.pop %v965
      %v967 = vmul.f32 %v875, 1.442695
      %v968 = vpow.pop %v967
      %v969 = vmul.f32 %v876, 1.442695
      %v970 = vpow.pop %v969
      %v971 = vmul.f32 %v877, 1.442695
      %v972 = vpow.pop %v971
      %v973 = vmul.f32 %v878, 1.442695
      %v974 = vpow.pop %v973
      %v975 = vmul.f32 %v879, 1.442695
      %v976 = vpow.pop %v975
      %v977 = vmul.f32 %v880, 1.442695
      %v978 = vpow.pop %v977
      %v979 = vmul.f32 %v881, 1.442695
      %v980 = vpow.pop %v979
      %v981 = vmul.f32 %v882, 1.442695
      %v982 = vpow.pop %v981
      %v983 = vmul.f32 %v883, 1.442695
      %v984 = vpow.pop %v983
      %v985 = vmul.f32 %v884, 1.442695
      %v986 = vpow.pop %v985
      %v987 = vmul.f32 %v885, 1.442695
      %v988 = vpow.pop %v987
      %v989 = vmul.f32 %v886, 1.442695
      %v990 = vpow.pop %v989
      %v991 = vmul.f32 %v887, 1.442695
      %v992 = vpow.pop %v991
      %v993 = vmul.f32 %v888, 1.442695
      %v994 = vpow.pop %v993
      %v995 = vmul.f32 %v889, 1.442695
      %v996 = vpow.pop %v995
      %v997 = vmul.f32 %v890, 1.442695
      %v998 = vpow.pop %v997
      %v999 = vmul.f32 %v891, 1.442695
      %v1000 = vpow.pop %v999
      %v1001 = vmul.f32 %v892, 1.442695
      %v1002 = vpow.pop %v1001
      %v1003 = vmul.f32 %v893, 1.442695
      %v1004 = vpow.pop %v1003
      %v1005 = vmul.f32 %v894, 1.442695
      %v1006 = vpow.pop %v1005
      %v1007 = vmul.f32 %v895, 1.442695
      %v1008 = vpow.pop %v1007
      %v1009 = vmul.f32 %v896, 1.442695
      %v1010 = vpow.pop %v1009
      %v1011 = vmul.f32 %v897, 1.442695
      %v1012 = vpow.pop %v1011
      %v1013 = vmul.f32 %v898, 1.442695
      %v1014 = vpow.pop %v1013
      %v1015 = vmul.f32 %v899, 1.442695
      %v1016 = vpow.pop %v1015
      %v1017 = vmul.f32 %v900, 1.442695
      %v1018 = vpow.pop %v1017
      %v1019 = vmul.f32 %v901, 1.442695
      %v1020 = vpow.pop %v1019
      %v1021 = vmul.f32 %v902, 1.442695
      %v1022 = vpow.pop %v1021
      %v1023 = vmul.f32 %v903, 1.442695
      %v1024 = vpow.pop %v1023
      %v1025 = vmul.f32 %v904, 1.442695
      %v1026 = vpow.pop %v1025
      %v1027 = vmul.f32 %v905, 1.442695
      %v1028 = vpow.pop %v1027
      %v1029 = vmul.f32 %v906, 1.442695
      %v1030 = vpow.pop %v1029
      %v1031 = vmul.f32 %v907, 1.442695
      %v1032 = vpow.pop %v1031
      %v1033 = vmul.f32 %v908, 1.442695
      %v1034 = vpow.pop %v1033
      %v1035 = vmul.f32 %v909, 1.442695
      %v1036 = vpow.pop %v1035
      %v1037 = vmul.f32 %v910, 1.442695
      %v1038 = vpow.pop %v1037
      %v1039 = vadd.f32 %v912, %v914
      %1040 = vadd.xlane.f32.xlu0 %v1039
      %v1041 = vpop.xlane.xlu0 %1040
      %v1042 = vadd.f32 %v916, %v918
      %1043 = vadd.xlane.f32.xlu0 %v1042
      %v1044 = vpop.xlane.xlu0 %1043
      %v1045 = vadd.f32 %v920, %v922
      %1046 = vadd.xlane.f32.xlu0 %v1045
      %v1047 = vpop.xlane.xlu0 %1046
      %v1048 = vadd.f32 %v924, %v926
      %1049 = vadd.xlane.f32.xlu0 %v1048
      %v1050 = vpop.xlane.xlu0 %1049
      %v1051 = vadd.f32 %v928, %v930
      %1052 = vadd.xlane.f32.xlu0 %v1051
      %v1053 = vpop.xlane.xlu0 %1052
      %v1054 = vadd.f32 %v932, %v934
      %1055 = vadd.xlane.f32.xlu0 %v1054
      %v1056 = vpop.xlane.xlu0 %1055
      %v1057 = vadd.f32 %v936, %v938
      %1058 = vadd.xlane.f32.xlu0 %v1057
      %v1059 = vpop.xlane.xlu0 %1058
      %v1060 = vadd.f32 %v940, %v942
      %1061 = vadd.xlane.f32.xlu0 %v1060
      %v1062 = vpop.xlane.xlu0 %1061
      %v1063 = vadd.f32 %v944, %v946
      %1064 = vadd.xlane.f32.xlu0 %v1063
      %v1065 = vpop.xlane.xlu0 %1064
      %v1066 = vadd.f32 %v948, %v950
      %1067 = vadd.xlane.f32.xlu0 %v1066
      %v1068 = vpop.xlane.xlu0 %1067
      %v1069 = vadd.f32 %v952, %v954
      %1070 = vadd.xlane.f32.xlu0 %v1069
      %v1071 = vpop.xlane.xlu0 %1070
      %v1072 = vadd.f32 %v956, %v958
      %1073 = vadd.xlane.f32.xlu0 %v1072
      %v1074 = vpop.xlane.xlu0 %1073
      %v1075 = vadd.f32 %v960, %v962
      %1076 = vadd.xlane.f32.xlu0 %v1075
      %v1077 = vpop.xlane.xlu0 %1076
      %v1078 = vadd.f32 %v964, %v966
      %1079 = vadd.xlane.f32.xlu0 %v1078
      %v1080 = vpop.xlane.xlu0 %1079
      %v1081 = vadd.f32 %v968, %v970
      %1082 = vadd.xlane.f32.xlu0 %v1081
      %v1083 = vpop.xlane.xlu0 %1082
      %v1084 = vadd.f32 %v972, %v974
      %1085 = vadd.xlane.f32.xlu0 %v1084
      %v1086 = vpop.xlane.xlu0 %1085
      %v1087 = vadd.f32 %v976, %v978
      %1088 = vadd.xlane.f32.xlu0 %v1087
      %v1089 = vpop.xlane.xlu0 %1088
      %v1090 = vadd.f32 %v980, %v982
      %1091 = vadd.xlane.f32.xlu0 %v1090
      %v1092 = vpop.xlane.xlu0 %1091
      %v1093 = vadd.f32 %v984, %v986
      %1094 = vadd.xlane.f32.xlu0 %v1093
      %v1095 = vpop.xlane.xlu0 %1094
      %v1096 = vadd.f32 %v988, %v990
      %1097 = vadd.xlane.f32.xlu0 %v1096
      %v1098 = vpop.xlane.xlu0 %1097
      %v1099 = vadd.f32 %v992, %v994
      %1100 = vadd.xlane.f32.xlu0 %v1099
      %v1101 = vpop.xlane.xlu0 %1100
      %v1102 = vadd.f32 %v996, %v998
      %1103 = vadd.xlane.f32.xlu0 %v1102
      %v1104 = vpop.xlane.xlu0 %1103
      %v1105 = vadd.f32 %v1000, %v1002
      %1106 = vadd.xlane.f32.xlu0 %v1105
      %v1107 = vpop.xlane.xlu0 %1106
      %v1108 = vadd.f32 %v1004, %v1006
      %1109 = vadd.xlane.f32.xlu0 %v1108
      %v1110 = vpop.xlane.xlu0 %1109
      %v1111 = vadd.f32 %v1008, %v1010
      %1112 = vadd.xlane.f32.xlu0 %v1111
      %v1113 = vpop.xlane.xlu0 %1112
      %v1114 = vadd.f32 %v1012, %v1014
      %1115 = vadd.xlane.f32.xlu0 %v1114
      %v1116 = vpop.xlane.xlu0 %1115
      %v1117 = vadd.f32 %v1016, %v1018
      %1118 = vadd.xlane.f32.xlu0 %v1117
      %v1119 = vpop.xlane.xlu0 %1118
      %v1120 = vadd.f32 %v1020, %v1022
      %1121 = vadd.xlane.f32.xlu0 %v1120
      %v1122 = vpop.xlane.xlu0 %1121
      %v1123 = vadd.f32 %v1024, %v1026
      %1124 = vadd.xlane.f32.xlu0 %v1123
      %v1125 = vpop.xlane.xlu0 %1124
      %v1126 = vadd.f32 %v1028, %v1030
      %1127 = vadd.xlane.f32.xlu0 %v1126
      %v1128 = vpop.xlane.xlu0 %1127
      %v1129 = vadd.f32 %v1032, %v1034
      %1130 = vadd.xlane.f32.xlu0 %v1129
      %v1131 = vpop.xlane.xlu0 %1130
      %v1132 = vadd.f32 %v1036, %v1038
      %1133 = vadd.xlane.f32.xlu0 %v1132
      %v1134 = vpop.xlane.xlu0 %1133
      %v1135 = vrcp.pop %v1041
      %v1136 = vrcp.pop %v1044
      %v1137 = vrcp.pop %v1047
      %v1138 = vrcp.pop %v1050
      %v1139 = vrcp.pop %v1053
      %v1140 = vrcp.pop %v1056
      %v1141 = vrcp.pop %v1059
      %v1142 = vrcp.pop %v1062
      %v1143 = vrcp.pop %v1065
      %v1144 = vrcp.pop %v1068
      %v1145 = vrcp.pop %v1071
      %v1146 = vrcp.pop %v1074
      %v1147 = vrcp.pop %v1077
      %v1148 = vrcp.pop %v1080
      %v1149 = vrcp.pop %v1083
      %v1150 = vrcp.pop %v1086
      %v1151 = vrcp.pop %v1089
      %v1152 = vrcp.pop %v1092
      %v1153 = vrcp.pop %v1095
      %v1154 = vrcp.pop %v1098
      %v1155 = vrcp.pop %v1101
      %v1156 = vrcp.pop %v1104
      %v1157 = vrcp.pop %v1107
      %v1158 = vrcp.pop %v1110
      %v1159 = vrcp.pop %v1113
      %v1160 = vrcp.pop %v1116
      %v1161 = vrcp.pop %v1119
      %v1162 = vrcp.pop %v1122
      %v1163 = vrcp.pop %v1125
      %v1164 = vrcp.pop %v1128
      %v1165 = vrcp.pop %v1131
      %v1166 = vrcp.pop %v1134
      %v1167 = vmul.f32 %v912, %v1135
      %v1168 = vmul.f32 %v914, %v1135
      %v1169 = vmul.f32 %v916, %v1136
      %v1170 = vmul.f32 %v918, %v1136
      %v1171 = vmul.f32 %v920, %v1137
      %v1172 = vmul.f32 %v922, %v1137
      %v1173 = vmul.f32 %v924, %v1138
      %v1174 = vmul.f32 %v926, %v1138
      %v1175 = vmul.f32 %v928, %v1139
      %v1176 = vmul.f32 %v930, %v1139
      %v1177 = vmul.f32 %v932, %v1140
      %v1178 = vmul.f32 %v934, %v1140
      %v1179 = vmul.f32 %v936, %v1141
      %v1180 = vmul.f32 %v938, %v1141
      %v1181 = vmul.f32 %v940, %v1142
      %v1182 = vmul.f32 %v942, %v1142
      %v1183 = vmul.f32 %v944, %v1143
      %v1184 = vmul.f32 %v946, %v1143
      %v1185 = vmul.f32 %v948, %v1144
      %v1186 = vmul.f32 %v950, %v1144
      %v1187 = vmul.f32 %v952, %v1145
      %v1188 = vmul.f32 %v954, %v1145
      %v1189 = vmul.f32 %v956, %v1146
      %v1190 = vmul.f32 %v958, %v1146
      %v1191 = vmul.f32 %v960, %v1147
      %v1192 = vmul.f32 %v962, %v1147
      %v1193 = vmul.f32 %v964, %v1148
      %v1194 = vmul.f32 %v966, %v1148
      %v1195 = vmul.f32 %v968, %v1149
      %v1196 = vmul.f32 %v970, %v1149
      %v1197 = vmul.f32 %v972, %v1150
      %v1198 = vmul.f32 %v974, %v1150
      %v1199 = vmul.f32 %v976, %v1151
      %v1200 = vmul.f32 %v978, %v1151
      %v1201 = vmul.f32 %v980, %v1152
      %v1202 = vmul.f32 %v982, %v1152
      %v1203 = vmul.f32 %v984, %v1153
      %v1204 = vmul.f32 %v986, %v1153
      %v1205 = vmul.f32 %v988, %v1154
      %v1206 = vmul.f32 %v990, %v1154
      %v1207 = vmul.f32 %v992, %v1155
      %v1208 = vmul.f32 %v994, %v1155
      %v1209 = vmul.f32 %v996, %v1156
      %v1210 = vmul.f32 %v998, %v1156
      %v1211 = vmul.f32 %v1000, %v1157
      %v1212 = vmul.f32 %v1002, %v1157
      %v1213 = vmul.f32 %v1004, %v1158
      %v1214 = vmul.f32 %v1006, %v1158
      %v1215 = vmul.f32 %v1008, %v1159
      %v1216 = vmul.f32 %v1010, %v1159
      %v1217 = vmul.f32 %v1012, %v1160
      %v1218 = vmul.f32 %v1014, %v1160
      %v1219 = vmul.f32 %v1016, %v1161
      %v1220 = vmul.f32 %v1018, %v1161
      %v1221 = vmul.f32 %v1020, %v1162
      %v1222 = vmul.f32 %v1022, %v1162
      %v1223 = vmul.f32 %v1024, %v1163
      %v1224 = vmul.f32 %v1026, %v1163
      %v1225 = vmul.f32 %v1028, %v1164
      %v1226 = vmul.f32 %v1030, %v1164
      %v1227 = vmul.f32 %v1032, %v1165
      %v1228 = vmul.f32 %v1034, %v1165
      %v1229 = vmul.f32 %v1036, %v1166
      %v1230 = vmul.f32 %v1038, %v1166
      %1231 = vmatpush.msra.mxu0 %v1197
      %1232 = vmatpush.msra.mxu0 %v1195
      %1233 = vmatpush.msra.mxu0 %v1193
      %1234 = vmatpush.msra.mxu0 %v1191
      %1235 = vmatpush.msra.mxu0 %v1189
      %1236 = vmatpush.msra.mxu0 %v1187
      %1237 = vmatpush.msra.mxu0 %v1185
      %1238 = vmatpush.msra.mxu0 %v1183
      %1239 = vmatpush.msra.mxu0 %v1181
      %1240 = vmatpush.msra.mxu0 %v1179
      %1241 = vmatpush.msra.mxu0 %v1177
      %1242 = vmatpush.msra.mxu0 %v1175
      %1243 = vmatpush.msra.mxu0 %v1173
      %1244 = vmatpush.msra.mxu0 %v1171
      %1245 = vmatpush.msra.mxu0 %v1169
      %1246 = vmatpush.msra.mxu0 %v1167
      %1247 = vmatmul.f32.gmra.mxu0 %v324
      %v1248 = vpop.f32.mrf.mxu0
      %v1249 = vadd.f32 0.0, %v1248
      %1250 = vmatmul.f32.gmra.mxu0 %v327
      %v1251 = vpop.f32.mrf.mxu0
      %v1252 = vadd.f32 0.0, %v1251
      %1253 = vdwg.mxu0
      %1254 = vmatpush.msra.mxu0 %v1229
      %1255 = vmatpush.msra.mxu0 %v1227
      %1256 = vmatpush.msra.mxu0 %v1225
      %1257 = vmatpush.msra.mxu0 %v1223
      %1258 = vmatpush.msra.mxu0 %v1221
      %1259 = vmatpush.msra.mxu0 %v1219
      %1260 = vmatpush.msra.mxu0 %v1217
      %1261 = vmatpush.msra.mxu0 %v1215
      %1262 = vmatpush.msra.mxu0 %v1213
      %1263 = vmatpush.msra.mxu0 %v1211
      %1264 = vmatpush.msra.mxu0 %v1209
      %1265 = vmatpush.msra.mxu0 %v1207
      %1266 = vmatpush.msra.mxu0 %v1205
      %1267 = vmatpush.msra.mxu0 %v1203
      %1268 = vmatpush.msra.mxu0 %v1201
      %1269 = vmatpush.msra.mxu0 %v1199
      %1270 = vmatmul.f32.gmra.mxu0 %v359
      %v1271 = vpop.f32.mrf.mxu0
      %v1272 = vadd.f32 %v1249, %v1271
      %1273 = vmatmul.f32.gmra.mxu0 %v362
      %v1274 = vpop.f32.mrf.mxu0
      %v1275 = vadd.f32 %v1252, %v1274
      %1276 = vdwg.mxu0
      %1277 = vmatpush.msra.mxu0 %v1198
      %1278 = vmatpush.msra.mxu0 %v1196
      %1279 = vmatpush.msra.mxu0 %v1194
      %1280 = vmatpush.msra.mxu0 %v1192
      %1281 = vmatpush.msra.mxu0 %v1190
      %1282 = vmatpush.msra.mxu0 %v1188
      %1283 = vmatpush.msra.mxu0 %v1186
      %1284 = vmatpush.msra.mxu0 %v1184
      %1285 = vmatpush.msra.mxu0 %v1182
      %1286 = vmatpush.msra.mxu0 %v1180
      %1287 = vmatpush.msra.mxu0 %v1178
      %1288 = vmatpush.msra.mxu0 %v1176
      %1289 = vmatpush.msra.mxu0 %v1174
      %1290 = vmatpush.msra.mxu0 %v1172
      %1291 = vmatpush.msra.mxu0 %v1170
      %1292 = vmatpush.msra.mxu0 %v1168
      %1293 = vmatmul.f32.gmra.mxu0 %v324
      %v1294 = vpop.f32.mrf.mxu0
      %v1295 = vadd.f32 0.0, %v1294
      %1296 = vmatmul.f32.gmra.mxu0 %v327
      %v1297 = vpop.f32.mrf.mxu0
      %v1298 = vadd.f32 0.0, %v1297
      %1299 = vdwg.mxu0
      %1300 = vmatpush.msra.mxu0 %v1230
      %1301 = vmatpush.msra.mxu0 %v1228
      %1302 = vmatpush.msra.mxu0 %v1226
      %1303 = vmatpush.msra.mxu0 %v1224
      %1304 = vmatpush.msra.mxu0 %v1222
      %1305 = vmatpush.msra.mxu0 %v1220
      %1306 = vmatpush.msra.mxu0 %v1218
      %1307 = vmatpush.msra.mxu0 %v1216
      %1308 = vmatpush.msra.mxu0 %v1214
      %1309 = vmatpush.msra.mxu0 %v1212
      %1310 = vmatpush.msra.mxu0 %v1210
      %1311 = vmatpush.msra.mxu0 %v1208
      %1312 = vmatpush.msra.mxu0 %v1206
      %1313 = vmatpush.msra.mxu0 %v1204
      %1314 = vmatpush.msra.mxu0 %v1202
      %1315 = vmatpush.msra.mxu0 %v1200
      %1316 = vmatmul.f32.gmra.mxu0 %v359
      %v1317 = vpop.f32.mrf.mxu0
      %v1318 = vadd.f32 %v1295, %v1317
      %1319 = vmatmul.f32.gmra.mxu0 %v362
      %v1320 = vpop.f32.mrf.mxu0
      %v1321 = vadd.f32 %v1298, %v1320
      %1322 = vdwg.mxu0
      %v1323 = vld [vmem:[%s3] sm:$0xff]
      %v1324 = vld [vmem:[%s3 + $0x8] sm:$0xff]
      %v1325 = vld [vmem:[%s3 + $0x10] sm:$0xff]
      %v1326 = vld [vmem:[%s3 + $0x18] sm:$0xff]
      %v1327 = vld [vmem:[%s4] sm:$0xff]
      %v1328 = vld [vmem:[%s4 + $0x8] sm:$0xff]
      %v1329 = vld [vmem:[%s4 + $0x10] sm:$0xff]
      %v1330 = vld [vmem:[%s4 + $0x18] sm:$0xff]
      %1332 = vset.pattern.permute.xlu0 0
      %1333 = vperm.xlu0 %1332, %v1327
      %v1334 = vpop.permute.xlu0 %1333
      %1337 = vset.pattern.permute.xlu0 0
      %1338 = vperm.xlu0 %1337, %v1328
      %v1339 = vpop.permute.xlu0 %1338
      %1342 = vset.pattern.permute.xlu0 0
      %1343 = vperm.xlu0 %1342, %v1329
      %v1344 = vpop.permute.xlu0 %1343
      %1347 = vset.pattern.permute.xlu0 0
      %1348 = vperm.xlu0 %1347, %v1330
      %v1349 = vpop.permute.xlu0 %1348
      %v1352 = vsel %vm428, %v1323, 0
      %v1355 = vsel %vm428, %v1324, 0
      %v1358 = vsel %vm428, %v1325, 0
      %v1361 = vsel %vm428, %v1326, 0
      %1363 = vmatpush.msra.mxu0 0.0
      %1364 = vmatpush.msra.mxu0 0.0
      %1365 = vmatpush.msra.mxu0 0.0
      %1366 = vmatpush.msra.mxu0 0.0
      %1367 = vmatpush.msra.mxu0 0.0
      %1368 = vmatpush.msra.mxu0 0.0
      %1369 = vmatpush.msra.mxu0 0.0
      %1370 = vmatpush.msra.mxu0 0.0
      %1371 = vmatpush.msra.mxu0 0.0
      %1372 = vmatpush.msra.mxu0 0.0
      %1373 = vmatpush.msra.mxu0 0.0
      %1374 = vmatpush.msra.mxu0 0.0
      %1375 = vmatpush.msra.mxu0 0.0
      %1376 = vmatpush.msra.mxu0 0.0
      %1377 = vmatpush.msra.mxu0 %v1275
      %1378 = vmatpush.msra.mxu0 %v1272
      %1379 = vmatmul.f32.gmra.mxu0 %v1352
      %v1380 = vpop.f32.mrf.mxu0
      %v1381 = vadd.f32 %v1334, %v1380
      %1382 = vmatmul.f32.gmra.mxu0 %v1355
      %v1383 = vpop.f32.mrf.mxu0
      %v1384 = vadd.f32 %v1339, %v1383
      %1385 = vmatmul.f32.gmra.mxu0 %v1358
      %v1386 = vpop.f32.mrf.mxu0
      %v1387 = vadd.f32 %v1344, %v1386
      %1388 = vmatmul.f32.gmra.mxu0 %v1361
      %v1389 = vpop.f32.mrf.mxu0
      %v1390 = vadd.f32 %v1349, %v1389
      %1391 = vdwg.mxu0
      %1392 = vmatpush.msra.mxu0 0.0
      %1393 = vmatpush.msra.mxu0 0.0
      %1394 = vmatpush.msra.mxu0 0.0
      %1395 = vmatpush.msra.mxu0 0.0
      %1396 = vmatpush.msra.mxu0 0.0
      %1397 = vmatpush.msra.mxu0 0.0
      %1398 = vmatpush.msra.mxu0 0.0
      %1399 = vmatpush.msra.mxu0 0.0
      %1400 = vmatpush.msra.mxu0 0.0
      %1401 = vmatpush.msra.mxu0 0.0
      %1402 = vmatpush.msra.mxu0 0.0
      %1403 = vmatpush.msra.mxu0 0.0
      %1404 = vmatpush.msra.mxu0 0.0
      %1405 = vmatpush.msra.mxu0 0.0
      %1406 = vmatpush.msra.mxu0 %v1321
      %1407 = vmatpush.msra.mxu0 %v1318
      %1408 = vmatmul.f32.gmra.mxu0 %v1352
      %v1409 = vpop.f32.mrf.mxu0
      %v1410 = vadd.f32 %v1334, %v1409
      %1411 = vmatmul.f32.gmra.mxu0 %v1355
      %v1412 = vpop.f32.mrf.mxu0
      %v1413 = vadd.f32 %v1339, %v1412
      %1414 = vmatmul.f32.gmra.mxu0 %v1358
      %v1415 = vpop.f32.mrf.mxu0
      %v1416 = vadd.f32 %v1344, %v1415
      %1417 = vmatmul.f32.gmra.mxu0 %v1361
      %v1418 = vpop.f32.mrf.mxu0
      %v1419 = vadd.f32 %v1349, %v1418
      %1420 = vdwg.mxu0
      %v1421 = vadd.f32 %v1381, %v225
      %v1422 = vadd.f32 %v1410, %v226
      %v1423 = vadd.f32 %v1384, %v227
      %v1424 = vadd.f32 %v1413, %v228
      %v1425 = vadd.f32 %v1387, %v229
      %v1426 = vadd.f32 %v1416, %v230
      %v1427 = vadd.f32 %v1390, %v231
      %v1428 = vadd.f32 %v1419, %v232
      %1429 = vst [vmem:[%s224] sm:$0xff] %v1421
      %1430 = vst [vmem:[%s224 + $0x8] sm:$0xff] %v1422
      %1431 = vst [vmem:[%s224 + $0x10] sm:$0xff] %v1423
      %1432 = vst [vmem:[%s224 + $0x18] sm:$0xff] %v1424
      %1433 = vst [vmem:[%s224 + $0x20] sm:$0xff] %v1425
      %1434 = vst [vmem:[%s224 + $0x28] sm:$0xff] %v1426
      %1435 = vst [vmem:[%s224 + $0x30] sm:$0xff] %v1427
      %1436 = vst [vmem:[%s224 + $0x38] sm:$0xff] %v1428
      %p1437 = scmp.lt.s32.totalorder %s16, 1
      %s1438 = scalar_select %p1437, %s16, 1
      %s1439 = smul.addr %s1438, 8
      %s1440 = smul.addr %s1439, 8
      %s1441 = scalar_lea.vmem %s5, %s1440
      // Predicated region
      $region41: #{nonlocal_block_2d.1} parent=39 // pred_check
        %p1442 = pneg %p144
      $region42: #{nonlocal_block_2d.1} parent=39 // pred_check_branch
        %1444 = sbr.rel (%p1442) target = $region44
      $region43: #{nonlocal_block_2d.1} parent=39 // pred_region
        _
      $region44: #{nonlocal_block_2d.1} parent=39 // pred_fallthru
        _
    $region40: #{nonlocal_block_2d.1} parent=5 // pred_fallthru
      _
    %p1445 = scmp.le.s32.totalorder 2, %s11
    // Predicated region
    $region45: #{nonlocal_block_2d.1} parent=5 // pred_check
      %p1446 = pneg %p1445
    $region46: #{nonlocal_block_2d.1} parent=5 // pred_check_branch
      %1448 = sbr.rel (%p1446) target = $region48
    $region47: #{nonlocal_block_2d.1} parent=5 // pred_region
      %s1449 = ssub.s32 %s11, 2
      // Predicated region
      $region49: #{nonlocal_block_2d.1} parent=47 // pred_check
        %p1450 = pneg %p150
      $region50: #{nonlocal_block_2d.1} parent=47 // pred_check_branch
        %1452 = sbr.rel (%p1450) target = $region52
      $region51: #{nonlocal_block_2d.1} parent=47 // pred_region
        %p1453 = scmp.lt.s32.totalorder %s17, 1
        %s1454 = scalar_select %p1453, %s17, 1
        %s1455 = smul.addr %s1454, 8
        %s1456 = smul.addr %s1455, 8
        %s1457 = scalar_lea.vmem %s5, %s1456
      $region52: #{nonlocal_block_2d.1} parent=47 // pred_fallthru
        _
    $region48: #{nonlocal_block_2d.1} parent=5 // pred_fallthru
      _
  $region6: #{nonlocal_block_2d.1} parent=0 // loop_footer
    %s15 = sadd.s32 1, %s11
  $region7: #{nonlocal_block_2d.1} parent=0 // loop_footer_branch
    %10 = sbr.rel target = $region3
  $region8: #{nonlocal_block_2d.1} parent=0 // loop_exit
    _

</llo_original>
